<compile_context>
chip_gen: v5e
topology: v5e:2x2
jax: 0.10.0
libtpu: 0.0.40
codegen_flags: <defaults>
</compile_context>

<pallas_src>
import functools
import math

import jax
import jax.numpy as jnp
from jax.experimental import pallas as pl
from jax.experimental.pallas import tpu as pltpu


def _round_up(x, m):
    return ((x + m - 1) // m) * m


def generator_kernel(x_ref, w_ref, b_ref, o_ref, acc_ref, m_ref, l_ref):
    # x_ref: (tm, d_model) bf16      w_ref: (d_model, tn) bf16
    # b_ref: (1, tn) f32             o_ref: (tm, nj, tn) out dtype (resident)
    # acc_ref: (nj, tm, tn) f32 logits stash (scratch)
    # m_ref/l_ref: (tm, 1) f32 running max / running sum-of-exp (scratch)
    j = pl.program_id(1)
    nj = pl.num_programs(1)

    @pl.when(j == 0)
    def _init():
        m_ref[...] = jnp.full(m_ref.shape, -jnp.inf, jnp.float32)
        l_ref[...] = jnp.zeros(l_ref.shape, jnp.float32)

    # MXU matmul: bf16 x bf16 -> f32 accumulate, then f32 bias add.
    logits = jnp.dot(x_ref[...], w_ref[...],
                     preferred_element_type=jnp.float32) + b_ref[...]

    # Stash raw logits for this vocab tile (leading-axis dynamic index).
    acc_ref[j] = logits

    # Online log-sum-exp update (all in f32; exp goes to the EUP slot).
    m_prev = m_ref[...]
    m_new = jnp.maximum(m_prev, jnp.max(logits, axis=-1, keepdims=True))
    alpha = jnp.exp(m_prev - m_new)
    l_ref[...] = alpha * l_ref[...] + jnp.sum(jnp.exp(logits - m_new),
                                              axis=-1, keepdims=True)
    m_ref[...] = m_new

    @pl.when(j == nj - 1)
    def _finalize():
        # lse computed once, then a single subtract per element.
        lse = m_ref[...] + jnp.log(l_ref[...])  # (tm, 1)
        # Static unrolled loop over vocab tiles writes the resident output
        # block.  (Static sublane-offset stores only; avoids dynamic
        # lane-offset stores which are not portably supported.)
        for jj in range(acc_ref.shape[0]):
            o_ref[:, jj, :] = (acc_ref[jj] - lse).astype(o_ref.dtype)


def generator_forward(x, w, b, *, tm=256, tn=512,
                      compute_dtype=jnp.bfloat16,
                      vmem_limit_bytes=64 * 1024 * 1024):
    """x: (batch, seq, d_model); w: (d_model, vocab); b: (vocab,)."""
    batch, seq, d_model = x.shape
    d_model_w, vocab = w.shape
    assert d_model_w == d_model, "weight shape mismatch"
    out_dtype = x.dtype

    n = batch * seq
    # Clamp tiles for small problems; keep sublane/lane alignment (8 / 128).
    tm = min(tm, _round_up(n, 8))
    tn = min(tn, _round_up(vocab, 128))
    n_p = _round_up(n, tm)
    vocab_p = _round_up(vocab, tn)
    ni, nj = n_p // tm, vocab_p // tn

    # bf16 matmul inputs (f32 accumulation happens in the kernel).
    x2 = x.reshape(n, d_model).astype(compute_dtype)
    w_c = w.astype(compute_dtype)
    b_f32 = b.astype(jnp.float32)

    if n_p != n:
        x2 = jnp.pad(x2, ((0, n_p - n), (0, 0)))
    if vocab_p != vocab:
        w_c = jnp.pad(w_c, ((0, 0), (0, vocab_p - vocab)))
        # Padded vocab columns get a huge negative bias so they contribute
        # nothing to the row max / sum-exp.
        b_f32 = jnp.pad(b_f32, (0, vocab_p - vocab), constant_values=-1e30)
    b2 = b_f32.reshape(1, vocab_p)

    # Output is laid out (n_p, nj, tn): contiguous, so the final reshape to
    # (n_p, vocab_p) is free.  The output block is resident across the vocab
    # axis and only written on the last vocab step.
    out3 = pl.pallas_call(
        generator_kernel,
        out_shape=jax.ShapeDtypeStruct((n_p, nj, tn), out_dtype),
        grid_spec=pltpu.PrefetchScalarGridSpec(
            num_scalar_prefetch=0,
            grid=(ni, nj),
            in_specs=[
                pl.BlockSpec((tm, d_model), lambda i, j: (i, 0)),   # x rows
                pl.BlockSpec((d_model, tn), lambda i, j: (0, j)),   # W tile
                pl.BlockSpec((1, tn), lambda i, j: (0, j)),         # bias tile
            ],
            out_specs=pl.BlockSpec((tm, nj, tn), lambda i, j: (i, 0, 0)),
            scratch_shapes=[
                pltpu.VMEM((nj, tm, tn), jnp.float32),  # logits stash
                pltpu.VMEM((tm, 1), jnp.float32),       # running max
                pltpu.VMEM((tm, 1), jnp.float32),       # running sum-exp
            ],
        ),
        compiler_params=pltpu.CompilerParams(
            dimension_semantics=("parallel", "arbitrary"),
            vmem_limit_bytes=vmem_limit_bytes,
        ),
    )(x2, w_c, b2)

    out2 = out3.reshape(n_p, vocab_p)[:n, :vocab]
    return out2.reshape(batch, seq, vocab)


if __name__ == "__main__":
    # Small shapes consistent with the module (d_model -> vocab projection).
    # Chosen to exercise row padding (n=20 -> 24) and multiple vocab tiles
    # with column padding (vocab=320, tn=128 -> 3 tiles, 64 padded columns).
    batch, seq, d_model, vocab = 2, 10, 32, 320

    key = jax.random.PRNGKey(0)
    kx, kw, kb = jax.random.split(key, 3)

    # Deterministic parameter init mimicking nn.Linear's default
    # U(-1/sqrt(d_model), 1/sqrt(d_model)); weight stored transposed.
    bound = 1.0 / math.sqrt(d_model)
    w = jax.random.uniform(kw, (d_model, vocab), jnp.float32, -bound, bound)
    b = jax.random.uniform(kb, (vocab,), jnp.float32, -bound, bound)
    x = jax.random.normal(kx, (batch, seq, d_model), jnp.float32)

    gen = jax.jit(functools.partial(generator_forward, tn=128))
    out = jax.block_until_ready(gen(x, w, b))

    # Reference in plain JAX with the same bf16-input / f32-accumulate math.
    xb = x.astype(jnp.bfloat16)
    wb = w.astype(jnp.bfloat16)
    logits = jnp.einsum("bsd,dv->bsv", xb, wb,
                        preferred_element_type=jnp.float32) + b
    ref = jax.nn.log_softmax(logits, axis=-1)

    assert out.shape == (batch, seq, vocab)
    assert bool(jnp.isfinite(out).all()), "non-finite output"
    assert jnp.allclose(out, ref, atol=1e-4, rtol=1e-4), "mismatch vs reference"

    print("KERNEL_OK")
</pallas_src>

<mosaic_0001>
module attributes {stable_mosaic.version = 11 : i64} {
  func.func @generator_kernel(%arg0: i32, %arg1: i32, %arg2: memref<24x32xbf16, #tpu.memory_space<vmem>>, %arg3: memref<32x128xbf16, #tpu.memory_space<vmem>>, %arg4: memref<1x128xf32, #tpu.memory_space<vmem>>, %arg5: memref<24x3x128xf32, #tpu.memory_space<vmem>>, %arg6: memref<3x24x128xf32, #tpu.memory_space<vmem>>, %arg7: memref<24x1xf32, #tpu.memory_space<vmem>>, %arg8: memref<24x1xf32, #tpu.memory_space<vmem>>) attributes {dimension_semantics = [#tpu.dimension_semantics<parallel>, #tpu.dimension_semantics<arbitrary>], iteration_bounds = array<i64: 1, 3>, scalar_prefetch = 0 : i64, scratch_operands = 3 : i64, tpu.core_type = #tpu.core_type<tc>, window_params = [{transform_indices = @transform_0, window_bounds = array<i64: 24, 32>}, {transform_indices = @transform_1, window_bounds = array<i64: 32, 128>}, {transform_indices = @transform_2, window_bounds = array<i64: 1, 128>}, {transform_indices = @transform_3, window_bounds = array<i64: 24, 3, 128>}]} {
    %c0_i32 = arith.constant 0 : i32
    %0 = arith.cmpi eq, %arg1, %c0_i32 : i32
    %1 = arith.extui %0 : i1 to i32
    %c0_i32_0 = arith.constant 0 : i32
    %2 = arith.cmpi ne, %1, %c0_i32_0 : i32
    scf.if %2 {
      %cst_19 = arith.constant 0xFF800000 : f32
      %32 = vector.broadcast %cst_19 : f32 to vector<24x1xf32>
      %c0_20 = arith.constant 0 : index
      %c0_21 = arith.constant 0 : index
      %33 = vector.load %arg7[%c0_20, %c0_21] : memref<24x1xf32, #tpu.memory_space<vmem>>, vector<24x1xf32>
      tpu.vector_store %arg7[%c0_20, %c0_21], %32 {strides = array<i32>} : memref<24x1xf32, #tpu.memory_space<vmem>>, vector<24x1xf32>,
      %cst_22 = arith.constant 0.000000e+00 : f32
      %34 = vector.broadcast %cst_22 : f32 to vector<24x1xf32>
      %c0_23 = arith.constant 0 : index
      %c0_24 = arith.constant 0 : index
      %35 = vector.load %arg8[%c0_23, %c0_24] : memref<24x1xf32, #tpu.memory_space<vmem>>, vector<24x1xf32>
      tpu.vector_store %arg8[%c0_23, %c0_24], %34 {strides = array<i32>} : memref<24x1xf32, #tpu.memory_space<vmem>>, vector<24x1xf32>,
    } else {
    }
    %c0 = arith.constant 0 : index
    %c0_1 = arith.constant 0 : index
    %3 = vector.load %arg2[%c0, %c0_1] : memref<24x32xbf16, #tpu.memory_space<vmem>>, vector<24x32xbf16>
    %c0_2 = arith.constant 0 : index
    %c0_3 = arith.constant 0 : index
    %4 = vector.load %arg3[%c0_2, %c0_3] : memref<32x128xbf16, #tpu.memory_space<vmem>>, vector<32x128xbf16>
    %cst = arith.constant dense<0.000000e+00> : vector<24x128xf32>
    %5 = tpu.matmul %3, %4, %cst {dimension_numbers = #tpu.dot_dimension_numbers<[1], [0], [0], [1], [0, 0, 1, 1], [], []>} : vector<24x32xbf16>, vector<32x128xbf16>, vector<24x128xf32> -> vector<24x128xf32>
    %c0_4 = arith.constant 0 : index
    %c0_5 = arith.constant 0 : index
    %6 = vector.load %arg4[%c0_4, %c0_5] : memref<1x128xf32, #tpu.memory_space<vmem>>, vector<1x128xf32>
    %7 = vector.broadcast %6 : vector<1x128xf32> to vector<24x128xf32>
    %8 = arith.addf %5, %7 : vector<24x128xf32>
    %9 = arith.index_cast %arg1 : i32 to index
    %c0_6 = arith.constant 0 : index
    %c0_7 = arith.constant 0 : index
    %10 = vector.load %arg6[%9, %c0_6, %c0_7] : memref<3x24x128xf32, #tpu.memory_space<vmem>>, vector<1x24x128xf32>
    %11 = vector.shape_cast %10 : vector<1x24x128xf32> to vector<24x128xf32>
    %12 = vector.shape_cast %8 : vector<24x128xf32> to vector<1x24x128xf32>
    tpu.vector_store %arg6[%9, %c0_6, %c0_7], %12 {strides = array<i32>} : memref<3x24x128xf32, #tpu.memory_space<vmem>>, vector<1x24x128xf32>,
    %c0_8 = arith.constant 0 : index
    %c0_9 = arith.constant 0 : index
    %13 = vector.load %arg7[%c0_8, %c0_9] : memref<24x1xf32, #tpu.memory_space<vmem>>, vector<24x1xf32>
    %cst_10 = arith.constant dense<0xFF800000> : vector<24xf32>
    %14 = vector.multi_reduction <maximumf>, %8, %cst_10 [1] : vector<24x128xf32> to vector<24xf32>
    %15 = vector.shape_cast %14 : vector<24xf32> to vector<24x1xf32>
    %16 = arith.maximumf %13, %15 : vector<24x1xf32>
    %17 = arith.subf %13, %16 : vector<24x1xf32>
    %18 = math.exp %17 : vector<24x1xf32>
    %c0_11 = arith.constant 0 : index
    %c0_12 = arith.constant 0 : index
    %19 = vector.load %arg8[%c0_11, %c0_12] : memref<24x1xf32, #tpu.memory_space<vmem>>, vector<24x1xf32>
    %20 = arith.mulf %18, %19 : vector<24x1xf32>
    %21 = vector.broadcast %16 : vector<24x1xf32> to vector<24x128xf32>
    %22 = arith.subf %8, %21 : vector<24x128xf32>
    %23 = math.exp %22 : vector<24x128xf32>
    %cst_13 = arith.constant dense<0.000000e+00> : vector<24xf32>
    %24 = vector.multi_reduction <add>, %23, %cst_13 [1] : vector<24x128xf32> to vector<24xf32>
    %25 = vector.shape_cast %24 : vector<24xf32> to vector<24x1xf32>
    %26 = arith.addf %20, %25 : vector<24x1xf32>
    %c0_14 = arith.constant 0 : index
    %c0_15 = arith.constant 0 : index
    %27 = vector.load %arg8[%c0_14, %c0_15] : memref<24x1xf32, #tpu.memory_space<vmem>>, vector<24x1xf32>
    tpu.vector_store %arg8[%c0_14, %c0_15], %26 {strides = array<i32>} : memref<24x1xf32, #tpu.memory_space<vmem>>, vector<24x1xf32>,
    %c0_16 = arith.constant 0 : index
    %c0_17 = arith.constant 0 : index
    %28 = vector.load %arg7[%c0_16, %c0_17] : memref<24x1xf32, #tpu.memory_space<vmem>>, vector<24x1xf32>
    tpu.vector_store %arg7[%c0_16, %c0_17], %16 {strides = array<i32>} : memref<24x1xf32, #tpu.memory_space<vmem>>, vector<24x1xf32>,
    %c2_i32 = arith.constant 2 : i32
    %29 = arith.cmpi eq, %arg1, %c2_i32 : i32
    %30 = arith.extui %29 : i1 to i32
    %c0_i32_18 = arith.constant 0 : i32
    %31 = arith.cmpi ne, %30, %c0_i32_18 : i32
    scf.if %31 {
      %c0_19 = arith.constant 0 : index
      %c0_20 = arith.constant 0 : index
      %32 = vector.load %arg7[%c0_19, %c0_20] : memref<24x1xf32, #tpu.memory_space<vmem>>, vector<24x1xf32>
      %c0_21 = arith.constant 0 : index
      %c0_22 = arith.constant 0 : index
      %33 = vector.load %arg8[%c0_21, %c0_22] : memref<24x1xf32, #tpu.memory_space<vmem>>, vector<24x1xf32>
      %34 = math.log %33 : vector<24x1xf32>
      %35 = arith.addf %32, %34 : vector<24x1xf32>
      %c0_23 = arith.constant 0 : index
      %c0_24 = arith.constant 0 : index
      %c0_25 = arith.constant 0 : index
      %36 = vector.load %arg6[%c0_23, %c0_24, %c0_25] : memref<3x24x128xf32, #tpu.memory_space<vmem>>, vector<1x24x128xf32>
      %37 = vector.shape_cast %36 : vector<1x24x128xf32> to vector<24x128xf32>
      %38 = vector.broadcast %35 : vector<24x1xf32> to vector<24x128xf32>
      %39 = arith.subf %37, %38 : vector<24x128xf32>
      %c0_26 = arith.constant 0 : index
      %c0_27 = arith.constant 0 : index
      %c0_28 = arith.constant 0 : index
      %40 = vector.load %arg5[%c0_26, %c0_27, %c0_28] : memref<24x3x128xf32, #tpu.memory_space<vmem>>, vector<24x1x128xf32>
      %41 = vector.shape_cast %40 : vector<24x1x128xf32> to vector<24x128xf32>
      %42 = vector.shape_cast %39 : vector<24x128xf32> to vector<24x1x128xf32>
      tpu.vector_store %arg5[%c0_26, %c0_27, %c0_28], %42 {strides = array<i32>} : memref<24x3x128xf32, #tpu.memory_space<vmem>>, vector<24x1x128xf32>,
      %c1 = arith.constant 1 : index
      %c0_29 = arith.constant 0 : index
      %c0_30 = arith.constant 0 : index
      %43 = vector.load %arg6[%c1, %c0_29, %c0_30] : memref<3x24x128xf32, #tpu.memory_space<vmem>>, vector<1x24x128xf32>
      %44 = vector.shape_cast %43 : vector<1x24x128xf32> to vector<24x128xf32>
      %45 = vector.broadcast %35 : vector<24x1xf32> to vector<24x128xf32>
      %46 = arith.subf %44, %45 : vector<24x128xf32>
      %c0_31 = arith.constant 0 : index
      %c1_32 = arith.constant 1 : index
      %c0_33 = arith.constant 0 : index
      %47 = vector.load %arg5[%c0_31, %c1_32, %c0_33] : memref<24x3x128xf32, #tpu.memory_space<vmem>>, vector<24x1x128xf32>
      %48 = vector.shape_cast %47 : vector<24x1x128xf32> to vector<24x128xf32>
      %49 = vector.shape_cast %46 : vector<24x128xf32> to vector<24x1x128xf32>
      tpu.vector_store %arg5[%c0_31, %c1_32, %c0_33], %49 {strides = array<i32>} : memref<24x3x128xf32, #tpu.memory_space<vmem>>, vector<24x1x128xf32>,
      %c2 = arith.constant 2 : index
      %c0_34 = arith.constant 0 : index
      %c0_35 = arith.constant 0 : index
      %50 = vector.load %arg6[%c2, %c0_34, %c0_35] : memref<3x24x128xf32, #tpu.memory_space<vmem>>, vector<1x24x128xf32>
      %51 = vector.shape_cast %50 : vector<1x24x128xf32> to vector<24x128xf32>
      %52 = vector.broadcast %35 : vector<24x1xf32> to vector<24x128xf32>
      %53 = arith.subf %51, %52 : vector<24x128xf32>
      %c0_36 = arith.constant 0 : index
      %c2_37 = arith.constant 2 : index
      %c0_38 = arith.constant 0 : index
      %54 = vector.load %arg5[%c0_36, %c2_37, %c0_38] : memref<24x3x128xf32, #tpu.memory_space<vmem>>, vector<24x1x128xf32>
      %55 = vector.shape_cast %54 : vector<24x1x128xf32> to vector<24x128xf32>
      %56 = vector.shape_cast %53 : vector<24x128xf32> to vector<24x1x128xf32>
      tpu.vector_store %arg5[%c0_36, %c2_37, %c0_38], %56 {strides = array<i32>} : memref<24x3x128xf32, #tpu.memory_space<vmem>>, vector<24x1x128xf32>,
    } else {
    }
    return
  }
  func.func @transform_0(%arg0: i32, %arg1: i32) -> (i32, i32) {
    %c0_i32 = arith.constant 0 : i32
    %c0_i32_0 = arith.constant 0 : i32
    return %arg0, %c0_i32 : i32, i32
  }
  func.func @transform_1(%arg0: i32, %arg1: i32) -> (i32, i32) {
    %c0_i32 = arith.constant 0 : i32
    %c0_i32_0 = arith.constant 0 : i32
    return %c0_i32, %arg1 : i32, i32
  }
  func.func @transform_2(%arg0: i32, %arg1: i32) -> (i32, i32) {
    %c0_i32 = arith.constant 0 : i32
    %c0_i32_0 = arith.constant 0 : i32
    return %c0_i32, %arg1 : i32, i32
  }
  func.func @transform_3(%arg0: i32, %arg1: i32) -> (i32, i32, i32) {
    %c0_i32 = arith.constant 0 : i32
    %c0_i32_0 = arith.constant 0 : i32
    %c0_i32_1 = arith.constant 0 : i32
    return %arg0, %c0_i32, %c0_i32_0 : i32, i32, i32
  }
}

</mosaic_0001>

<llo_original>
// kernel: generator_forward.1
$region0: #{generator_forward.1}
  #allocation0 [shape = 'u32[]', space=smem, size = 0x4, offset = 0x4, fixed_abs, tag = 'smem constant byte address 0x4 - core index']
  #allocation1 [shape = 'u32[72,128]{1,0:T(1,128)}', space=vmem, size = 0x9000, scoped, tag = 'internal scratch']
  #allocation2 [shape = 'f32[3,24,128]{2,1,0:T(8,128)}', space=vmem, size = 0x9000, scoped, tag = 'scratch operand']
  #allocation3 [shape = 'f32[24,1]{1,0:T(8,128)}', space=vmem, size = 0x3000, scoped, tag = 'scratch operand']
  #allocation4 [shape = 'f32[24,1]{1,0:T(8,128)}', space=vmem, size = 0x3000, scoped, tag = 'scratch operand']
  %s0 = inlined_call_operand.vmem [shape: bf16[24,32], index: 0, kind: input, shape index: {}]
  %s1 = inlined_call_operand.vmem [shape: bf16[32,384], index: 1, kind: input, shape index: {}]
  %s2 = inlined_call_operand.vmem [shape: f32[1,384], index: 2, kind: input, shape index: {}]
  %s3 = inlined_call_operand.vmem [shape: f32[24,3,128], index: 3, kind: output, shape index: {}]
  %s4 = sld [smem:[#allocation0]]
  $region94: #{generator_forward.1} parent=0
    _
  %s6 = ssub.s32 1, %s4
  %s7 = scalar_select 0, %s6, %s4
  $region1: #{generator_forward.1} parent=0
    #allocation5 [shape = 'u8[16384]{0}', space=vmem, size = 0x4000, scoped, tag = 'input window, operand 1']
    loop: start=0, step=1, limit=5
    $region2: #{generator_forward.1} parent=1 // loop_pre_header
      _
    $region3: #{generator_forward.1} parent=1 // loop_header
      %s9 = sphi 0, %s13
      %p10 = scmp.ge.s32.totalorder %s9, 5
      %s16 = sphi 0, %s28
      %s17 = sphi 0, %s24
      %s18 = sphi 0, %s16
      %s19 = sphi 0, %s17
      %s20 = sphi 0, %s18
      %s21 = sphi 0, %s19
      %s31 = sphi 0, %s33
      %s34 = sphi 0, %s31
      %s35 = sphi 0, %s34
      %s51 = sphi 0, %s35
      %s57 = sphi 0, %s59
      %s60 = sphi 0, %s57
      %s61 = sphi 0, %s60
      %s77 = sphi 0, %s61
      %s83 = sphi 0, %s85
      %s86 = sphi 0, %s83
      %s87 = sphi 0, %s86
      %s103 = sphi 0, %s87
      %s109 = sphi 0, %s111
      %s112 = sphi 0, %s109
      %s113 = sphi 0, %s112
      %s129 = sphi 0, %s113
    $region4: #{generator_forward.1} parent=1 // loop_header_branch
      %12 = sbr.rel (%p10) target = $region8
    $region5: #{generator_forward.1} parent=1 // loop_body
      %s14 = ssub.s32 %s9, 1
      %s15 = ssub.s32 %s9, 2
      %s22 = sadd.s32 1, %s17
      %p23 = scmp.ge.s32.totalorder %s22, 3
      %s24 = scalar_select %p23, 0, %s22
      %s25 = sadd.s32 1, %s16
      %s26 = scalar_select %p23, %s25, %s16
      %p27 = scmp.ge.s32.totalorder %s26, 1
      %s28 = scalar_select %p27, 0, %s26
      %s29 = ssub.s32 %s16, %s28
      %p30 = scmp.eq.s32.totalorder %s29, 0
      %s32 = sadd.s32 %s31, 1
      %s33 = scalar_select %p30, %s31, %s32
      %p36 = pneg %p30
      %p37 = scmp.eq.s32.totalorder %s9, 2
      %p38 = por %p36, %p37
      %p39 = scmp.ne.s32.totalorder %s31, %s34
      %p40 = scmp.eq.s32.totalorder %s9, 0
      %p41 = por %p39, %p40
      %p42 = scmp.ne.s32.totalorder %s31, %s34
      %p43 = scmp.eq.s32.totalorder %s14, 2
      %p44 = por %p42, %p43
      %p45 = scmp.ne.s32.totalorder %s34, %s35
      %p46 = scmp.eq.s32.totalorder %s14, 0
      %p47 = por %p45, %p46
      %p48 = scmp.ne.s32.totalorder %s34, %s35
      %p49 = scmp.eq.s32.totalorder %s15, 2
      %p50 = por %p48, %p49
      %p52 = scmp.ne.s32.totalorder %s35, %s51
      %p53 = scmp.eq.s32.totalorder %s15, 0
      %p54 = por %p52, %p53
      %s55 = ssub.s32 %s17, %s24
      %p56 = scmp.eq.s32.totalorder %s55, 0
      %s58 = sadd.s32 %s57, 1
      %s59 = scalar_select %p56, %s57, %s58
      %p62 = pneg %p56
      %p63 = scmp.eq.s32.totalorder %s9, 2
      %p64 = por %p62, %p63
      %p65 = scmp.ne.s32.totalorder %s57, %s60
      %p66 = scmp.eq.s32.totalorder %s9, 0
      %p67 = por %p65, %p66
      %p68 = scmp.ne.s32.totalorder %s57, %s60
      %p69 = scmp.eq.s32.totalorder %s14, 2
      %p70 = por %p68, %p69
      %p71 = scmp.ne.s32.totalorder %s60, %s61
      %p72 = scmp.eq.s32.totalorder %s14, 0
      %p73 = por %p71, %p72
      %p74 = scmp.ne.s32.totalorder %s60, %s61
      %p75 = scmp.eq.s32.totalorder %s15, 2
      %p76 = por %p74, %p75
      %p78 = scmp.ne.s32.totalorder %s61, %s77
      %p79 = scmp.eq.s32.totalorder %s15, 0
      %p80 = por %p78, %p79
      %s81 = ssub.s32 %s17, %s24
      %p82 = scmp.eq.s32.totalorder %s81, 0
      %s84 = sadd.s32 %s83, 1
      %s85 = scalar_select %p82, %s83, %s84
      %p88 = pneg %p82
      %p89 = scmp.eq.s32.totalorder %s9, 2
      %p90 = por %p88, %p89
      %p91 = scmp.ne.s32.totalorder %s83, %s86
      %p92 = scmp.eq.s32.totalorder %s9, 0
      %p93 = por %p91, %p92
      %p94 = scmp.ne.s32.totalorder %s83, %s86
      %p95 = scmp.eq.s32.totalorder %s14, 2
      %p96 = por %p94, %p95
      %p97 = scmp.ne.s32.totalorder %s86, %s87
      %p98 = scmp.eq.s32.totalorder %s14, 0
      %p99 = por %p97, %p98
      %p100 = scmp.ne.s32.totalorder %s86, %s87
      %p101 = scmp.eq.s32.totalorder %s15, 2
      %p102 = por %p100, %p101
      %p104 = scmp.ne.s32.totalorder %s87, %s103
      %p105 = scmp.eq.s32.totalorder %s15, 0
      %p106 = por %p104, %p105
      %s107 = ssub.s32 %s16, %s28
      %p108 = scmp.eq.s32.totalorder %s107, 0
      %s110 = sadd.s32 %s109, 1
      %s111 = scalar_select %p108, %s109, %s110
      %p114 = pneg %p108
      %p115 = scmp.eq.s32.totalorder %s9, 2
      %p116 = por %p114, %p115
      %p117 = scmp.ne.s32.totalorder %s109, %s112
      %p118 = scmp.eq.s32.totalorder %s9, 0
      %p119 = por %p117, %p118
      %p120 = scmp.ne.s32.totalorder %s109, %s112
      %p121 = scmp.eq.s32.totalorder %s14, 2
      %p122 = por %p120, %p121
      %p123 = scmp.ne.s32.totalorder %s112, %s113
      %p124 = scmp.eq.s32.totalorder %s14, 0
      %p125 = por %p123, %p124
      %p126 = scmp.ne.s32.totalorder %s112, %s113
      %p127 = scmp.eq.s32.totalorder %s15, 2
      %p128 = por %p126, %p127
      %p130 = scmp.ne.s32.totalorder %s113, %s129
      %p131 = scmp.eq.s32.totalorder %s15, 0
      %p132 = por %p130, %p131
      %p133 = scmp.le.s32.totalorder 1, %s9
      %p134 = scmp.lt.s32.totalorder %s9, 4
      %p135 = pnand %p133, %p134
      %p136 = pneg %p135
      // Predicated region
      $region9: #{generator_forward.1} parent=5 // pred_check
        _
      $region10: #{generator_forward.1} parent=5 // pred_check_branch
        %138 = sbr.rel (%p135) target = $region12
      $region11: #{generator_forward.1} parent=5 // pred_region
        %s139 = ssub.s32 %s9, 1
        // Predicated region
        $region13: #{generator_forward.1} parent=11 // pred_check
          %p140 = pneg %p47
        $region14: #{generator_forward.1} parent=11 // pred_check_branch
          %142 = sbr.rel (%p140) target = $region16
        $region15: #{generator_forward.1} parent=11 // pred_region
          %s143 = smul.u32 3, %s18
          %p144 = scmp.lt.s32.totalorder %s143, 2
          %s145 = scalar_select %p144, %s143, 2
          %s146 = smul.addr %s145, 4
          %s147 = scalar_lea.vmem %s0, %s146
          %s148 = smul.u32 3, %s18
        $region16: #{generator_forward.1} parent=11 // pred_fallthru
          _
      $region12: #{generator_forward.1} parent=5 // pred_fallthru
        _
      %p149 = scmp.lt.s32.totalorder %s9, 3
      // Predicated region
      $region17: #{generator_forward.1} parent=5 // pred_check
        %p150 = pneg %p149
      $region18: #{generator_forward.1} parent=5 // pred_check_branch
        %152 = sbr.rel (%p150) target = $region20
      $region19: #{generator_forward.1} parent=5 // pred_region
        // Predicated region
        $region21: #{generator_forward.1} parent=19 // pred_check
          %p153 = pneg %p67
        $region22: #{generator_forward.1} parent=19 // pred_check_branch
          %155 = sbr.rel (%p153) target = $region24
        $region23: #{generator_forward.1} parent=19 // pred_region
          %s156 = sand.u32 %s57, 1
          %s157 = sand.u32 %s57, 1
          %s158 = smul.addr %s157, 16
          %s159 = scalar_lea.vmem [#allocation5], %s158
          %s160 = smul.addr %s17, 4
          %s161 = scalar_lea.vmem %s1, %s160
          // Predicated region
          $region25: #{generator_forward.1} parent=23 // pred_check
            _
          $region26: #{generator_forward.1} parent=23 // pred_check_branch
            %163 = sbr.rel (0) target = $region28
          $region27: #{generator_forward.1} parent=23 // pred_region
            // Predicated region
            $region29: #{generator_forward.1} parent=27 // pred_check
              _
            $region30: #{generator_forward.1} parent=27 // pred_check_branch
              %165 = sbr.rel target = $region32
            $region31: #{generator_forward.1} parent=27 // pred_region
              // Predicated region
              $region44: #{generator_forward.1} parent=31 // pred_check
                _
              $region45: #{generator_forward.1} parent=31 // pred_check_branch
                %187 = sbr.rel (0) target = $region47
              $region46: #{generator_forward.1} parent=31 // pred_region
                loop: start=0, step=1, limit=1
                $region48: #{generator_forward.1} parent=46 // loop_pre_header
                  _
                $region49: #{generator_forward.1} parent=46 // loop_header
                  %s189 = sphi 0, %s193
                  %p190 = scmp.ge.s32.totalorder %s189, 1
                  %s194 = sphi %s161, %s161
                  %s195 = sphi %s159, %s159
                $region50: #{generator_forward.1} parent=46 // loop_header_branch
                  %192 = sbr.rel (%p190) target = $region54
                $region51: #{generator_forward.1} parent=46 // loop_body
                  _
                $region52: #{generator_forward.1} parent=46 // loop_footer
                  %s193 = sadd.s32 1, %s189
                $region53: #{generator_forward.1} parent=46 // loop_footer_branch
                  %188 = sbr.rel target = $region49
                $region54: #{generator_forward.1} parent=46 // loop_exit
                  _
                %s197 = ssub.s32 16, 1
                loop: start=0, step=1, limit=1
                $region55: #{generator_forward.1} parent=46 // loop_pre_header
                  _
                $region56: #{generator_forward.1} parent=46 // loop_header
                  %s199 = sphi 0, %s203
                  %p200 = scmp.ge.s32.totalorder %s199, 1
                  %s204 = sphi %s161, %s161
                  %s205 = sphi %s159, %s159
                $region57: #{generator_forward.1} parent=46 // loop_header_branch
                  %202 = sbr.rel (%p200) target = $region61
                $region58: #{generator_forward.1} parent=46 // loop_body
                  %v206 = vld [vmem:[%s204] sm:%s197]
                  %207 = vst [vmem:[%s205] sm:%s197] %v206
                  %v208 = vld [vmem:[%s204 + $0xc] sm:%s197]
                  %209 = vst [vmem:[%s205 + $0x4] sm:%s197] %v208
                  %v210 = vld [vmem:[%s204 + $0x18] sm:%s197]
                  %211 = vst [vmem:[%s205 + $0x8] sm:%s197] %v210
                  %v212 = vld [vmem:[%s204 + $0x24] sm:%s197]
                  %213 = vst [vmem:[%s205 + $0xc] sm:%s197] %v212
                $region59: #{generator_forward.1} parent=46 // loop_footer
                  %s203 = sadd.s32 1, %s199
                $region60: #{generator_forward.1} parent=46 // loop_footer_branch
                  %198 = sbr.rel target = $region56
                $region61: #{generator_forward.1} parent=46 // loop_exit
                  _
              $region47: #{generator_forward.1} parent=31 // pred_fallthru
                _
            $region32: #{generator_forward.1} parent=27 // pred_fallthru
              _
            // Predicated region
            $region33: #{generator_forward.1} parent=27 // pred_check
              _
            $region34: #{generator_forward.1} parent=27 // pred_check_branch
              %167 = sbr.rel (0) target = $region36
            $region35: #{generator_forward.1} parent=27 // pred_region
              %s169 = ssub.s32 16, 1
              loop: start=0, step=1, limit=1
              $region37: #{generator_forward.1} parent=35 // loop_pre_header
                _
              $region38: #{generator_forward.1} parent=35 // loop_header
                %s171 = sphi 0, %s175
                %p172 = scmp.ge.s32.totalorder %s171, 1
                %s176 = sphi %s161, %s161
                %s177 = sphi %s159, %s159
              $region39: #{generator_forward.1} parent=35 // loop_header_branch
                %174 = sbr.rel (%p172) target = $region43
              $region40: #{generator_forward.1} parent=35 // loop_body
                %v178 = vld [vmem:[%s176] sm:%s169]
                %179 = vst [vmem:[%s177] sm:%s169] %v178
                %v180 = vld [vmem:[%s176 + $0xc] sm:%s169]
                %181 = vst [vmem:[%s177 + $0x4] sm:%s169] %v180
                %v182 = vld [vmem:[%s176 + $0x18] sm:%s169]
                %183 = vst [vmem:[%s177 + $0x8] sm:%s169] %v182
                %v184 = vld [vmem:[%s176 + $0x24] sm:%s169]
                %185 = vst [vmem:[%s177 + $0xc] sm:%s169] %v184
              $region41: #{generator_forward.1} parent=35 // loop_footer
                %s175 = sadd.s32 1, %s171
              $region42: #{generator_forward.1} parent=35 // loop_footer_branch
                %170 = sbr.rel target = $region38
              $region43: #{generator_forward.1} parent=35 // loop_exit
                _
            $region36: #{generator_forward.1} parent=27 // pred_fallthru
              _
          $region28: #{generator_forward.1} parent=23 // pred_fallthru
            _
          %214 = vnop
        $region24: #{generator_forward.1} parent=19 // pred_fallthru
          _
        // Predicated region
        $region62: #{generator_forward.1} parent=19 // pred_check
          %p215 = pneg %p93
        $region63: #{generator_forward.1} parent=19 // pred_check_branch
          %217 = sbr.rel (%p215) target = $region65
        $region64: #{generator_forward.1} parent=19 // pred_region
          %p218 = scmp.lt.s32.totalorder %s17, 2
          %s219 = scalar_select %p218, %s17, 2
          %s220 = scalar_lea.vmem %s2, %s219
        $region65: #{generator_forward.1} parent=19 // pred_fallthru
          _
      $region20: #{generator_forward.1} parent=5 // pred_fallthru
        _
      %p221 = scmp.le.s32.totalorder 1, %s9
      %p222 = scmp.lt.s32.totalorder %s9, 4
      %p223 = pnand %p221, %p222
      %p224 = pneg %p223
      // Predicated region
      $region66: #{generator_forward.1} parent=5 // pred_check
        _
      $region67: #{generator_forward.1} parent=5 // pred_check_branch
        %226 = sbr.rel (%p223) target = $region69
      $region68: #{generator_forward.1} parent=5 // pred_region
        %s227 = ssub.s32 %s9, 1
        %s228 = sand.u32 %s60, 1
        %s229 = sand.u32 %s60, 1
        %s230 = smul.addr %s229, 16
        %s231 = scalar_lea.vmem [#allocation5], %s230
        // Predicated region
        $region70: #{generator_forward.1} parent=68 // pred_check
          %p232 = pneg %p73
        $region71: #{generator_forward.1} parent=68 // pred_check_branch
          %234 = sbr.rel (%p232) target = $region73
        $region72: #{generator_forward.1} parent=68 // pred_region
          _
        $region73: #{generator_forward.1} parent=68 // pred_fallthru
          _
        %s235 = smul.u32 3, %s18
        %p236 = scmp.lt.s32.totalorder %s235, 2
        %s237 = scalar_select %p236, %s235, 2
        %s238 = smul.addr %s237, 4
        %s239 = scalar_lea.vmem %s0, %s238
        %p240 = pneg %p47
        %p241 = pneg %p44
        %s242 = sand.u32 %s60, 1
        %s243 = sand.u32 %s60, 1
        %s244 = smul.addr %s243, 16
        %s245 = scalar_lea.vmem [#allocation5], %s244
        %p246 = pneg %p73
        %p247 = pneg %p70
        %p248 = scmp.lt.s32.totalorder %s19, 2
        %s249 = scalar_select %p248, %s19, 2
        %s250 = scalar_lea.vmem %s2, %s249
        %p251 = pneg %p99
        %p252 = pneg %p96
        %p253 = pneg %p125
        %p254 = pneg %p122
        %s255 = smul.u32 24, %s18
        %p256 = scmp.lt.s32.totalorder %s255, 23
        %s257 = scalar_select %p256, %s255, 23
        %s258 = smul.addr %s257, 4
        %s259 = scalar_lea.vmem %s3, %s258
        %s260 = smul.u32 3, %s18
        %p261 = scmp.lt.s32.totalorder %s260, 2
        %s262 = scalar_select %p261, %s260, 2
        %s263 = smul.addr %s262, 4
        %s264 = scalar_lea.vmem %s0, %s263
        %s265 = smul.u32 3, %s18
        %p266 = scmp.lt.s32.totalorder %s19, 2
        %s267 = scalar_select %p266, %s19, 2
        %s268 = scalar_lea.vmem %s2, %s267
        %s269 = smul.u32 24, %s18
        %p270 = scmp.lt.s32.totalorder %s269, 23
        %s271 = scalar_select %p270, %s269, 23
        %s272 = smul.addr %s271, 4
        %s273 = scalar_lea.vmem %s3, %s272
        %s274 = smul.u32 24, %s18
        %p276 = scmp.eq.s32.totalorder %s19, 0
        // Predicated region
        $region74: #{generator_forward.1} parent=68 // pred_check
          %p277 = pneg %p276
        $region75: #{generator_forward.1} parent=68 // pred_check_branch
          %279 = sbr.rel (%p277) target = $region77
        $region76: #{generator_forward.1} parent=68 // pred_region
          %vm280 = vcmask 7168
          %281 = vst.msk [vmem:[#allocation3] sm:$0xff] %vm280, -inf
          %282 = vst.msk [vmem:[#allocation3 + $0x8] sm:$0xff] %vm280, -inf
          %283 = vst.msk [vmem:[#allocation3 + $0x10] sm:$0xff] %vm280, -inf
          %284 = vst.msk [vmem:[#allocation4] sm:$0xff] %vm280, 0.0
          %285 = vst.msk [vmem:[#allocation4 + $0x8] sm:$0xff] %vm280, 0.0
          %286 = vst.msk [vmem:[#allocation4 + $0x10] sm:$0xff] %vm280, 0.0
        $region77: #{generator_forward.1} parent=68 // pred_fallthru
          _
        %v287 = vld [vmem:[%s264] sm:$0xf]
        %v288 = vld [vmem:[%s264 + $0x4] sm:$0xf]
        %v289 = vld [vmem:[%s264 + $0x8] sm:$0xf]
        %v290 = vld [vmem:[%s231] sm:$0xf]
        %v291 = vld [vmem:[%s231 + $0x4] sm:$0xf]
        %v292 = vld [vmem:[%s231 + $0x8] sm:$0xf]
        %v293 = vld [vmem:[%s231 + $0xc] sm:$0xf]
        %v294 = vld [vmem:[%s268] sm:$0x1]
        %v296 = vperm.slane %v294, 0
        %v301 = vunpack.c.l.b16 %v287
        %v302 = vunpack.c.l.b16 %v288
        %v303 = vunpack.c.l.b16 %v289
        %v304 = vpack.c.b16 %v302, %v301
        %v305 = vpack.c.b16 %v303, %v303
        %v310 = vunpack.c.l.b16 %v290
        %v311 = vunpack.c.l.b16 %v291
        %v312 = vunpack.c.l.b16 %v292
        %v313 = vunpack.c.l.b16 %v293
        %v314 = vpack.c.b16 %v311, %v310
        %v315 = vpack.c.b16 %v313, %v312
        %vm318 = vcmask 261120
        %v320 = vsel %vm318, %v304, 0
        %v323 = vsel %vm318, %v305, 0
        %325 = vmatpush.bf16.msra.mxu0 0
        %326 = vmatpush.bf16.msra.mxu0 0
        %327 = vmatpush.bf16.msra.mxu0 0
        %328 = vmatpush.bf16.msra.mxu0 0
        %329 = vmatpush.bf16.msra.mxu0 0
        %330 = vmatpush.bf16.msra.mxu0 0
        %331 = vmatpush.bf16.msra.mxu0 %v315
        %332 = vmatpush.bf16.msra.mxu0 %v314
        %333 = vmatmul.bf16.gmra.mxu0 %v320
        %v334 = vpop.f32.mrf.mxu0
        %v335 = vadd.f32 %v296, %v334
        %v336 = vpop.f32.mrf.mxu0
        %v337 = vadd.f32 %v296, %v336
        %338 = vmatmul.bf16.gmra.mxu0 %v323
        %v339 = vpop.f32.mrf.mxu0
        %v340 = vadd.f32 %v296, %v339
        %v341 = vpop.f32.mrf.mxu0
        %342 = vdwg.mxu0
        %s343 = smul.u32 %s19, 24
        %s344 = scalar_lea.vmem [#allocation2], %s343
        %345 = vst [vmem:[%s344] sm:$0xff] %v335
        %346 = vst [vmem:[%s344 + $0x8] sm:$0xff] %v337
        %347 = vst [vmem:[%s344 + $0x10] sm:$0xff] %v340
        %v348 = vld [vmem:[#allocation3] sm:$0xff]
        %v349 = vld [vmem:[#allocation3 + $0x8] sm:$0xff]
        %v350 = vld [vmem:[#allocation3 + $0x10] sm:$0xff]
        %351 = vmax.xlane.f32.xlu0 %v335
        %v352 = vpop.xlane.xlu0 %351
        %353 = vmax.xlane.f32.xlu0 %v337
        %v354 = vpop.xlane.xlu0 %353
        %355 = vmax.xlane.f32.xlu0 %v340
        %v356 = vpop.xlane.xlu0 %355
        %v357 = vmax.f32 %v348, %v352
        %v358 = vmax.f32 %v349, %v354
        %v359 = vmax.f32 %v350, %v356
        %v360 = vsub.f32 %v348, %v357
        %v361 = vsub.f32 %v349, %v358
        %v362 = vsub.f32 %v350, %v359
        %v363 = vmul.f32 %v360, 1.442695
        %v364 = vpow.pop %v363
        %v365 = vmul.f32 %v361, 1.442695
        %v366 = vpow.pop %v365
        %v367 = vmul.f32 %v362, 1.442695
        %v368 = vpow.pop %v367
        %v369 = vld [vmem:[#allocation4] sm:$0xff]
        %v370 = vld [vmem:[#allocation4 + $0x8] sm:$0xff]
        %v371 = vld [vmem:[#allocation4 + $0x10] sm:$0xff]
        %v372 = vmul.f32 %v364, %v369
        %v373 = vmul.f32 %v366, %v370
        %v374 = vmul.f32 %v368, %v371
        %376 = vset.pattern.permute.xlu0 0
        %377 = vperm.xlu0 %376, %v357
        %v378 = vpop.permute.xlu0 %377
        %381 = vset.pattern.permute.xlu0 0
        %382 = vperm.xlu0 %381, %v358
        %v383 = vpop.permute.xlu0 %382
        %386 = vset.pattern.permute.xlu0 0
        %387 = vperm.xlu0 %386, %v359
        %v388 = vpop.permute.xlu0 %387
        %v390 = vsub.f32 %v335, %v378
        %v391 = vsub.f32 %v337, %v383
        %v392 = vsub.f32 %v340, %v388
        %v393 = vmul.f32 %v390, 1.442695
        %v394 = vpow.pop %v393
        %v395 = vmul.f32 %v391, 1.442695
        %v396 = vpow.pop %v395
        %v397 = vmul.f32 %v392, 1.442695
        %v398 = vpow.pop %v397
        %399 = vadd.xlane.f32.xlu0 %v394
        %v400 = vpop.xlane.xlu0 %399
        %401 = vadd.xlane.f32.xlu0 %v396
        %v402 = vpop.xlane.xlu0 %401
        %403 = vadd.xlane.f32.xlu0 %v398
        %v404 = vpop.xlane.xlu0 %403
        %v405 = vadd.f32 %v372, %v400
        %v406 = vadd.f32 %v373, %v402
        %v407 = vadd.f32 %v374, %v404
        %vm408 = vcmask 7168
        %409 = vst.msk [vmem:[#allocation4] sm:$0xff] %vm408, %v405
        %410 = vst.msk [vmem:[#allocation4 + $0x8] sm:$0xff] %vm408, %v406
        %411 = vst.msk [vmem:[#allocation4 + $0x10] sm:$0xff] %vm408, %v407
        %412 = vst.msk [vmem:[#allocation3] sm:$0xff] %vm408, %v357
        %413 = vst.msk [vmem:[#allocation3 + $0x8] sm:$0xff] %vm408, %v358
        %414 = vst.msk [vmem:[#allocation3 + $0x10] sm:$0xff] %vm408, %v359
        %p415 = scmp.eq.s32.totalorder %s19, 2
        // Predicated region
        $region78: #{generator_forward.1} parent=68 // pred_check
          %p416 = pneg %p415
        $region79: #{generator_forward.1} parent=68 // pred_check_branch
          %418 = sbr.rel (%p416) target = $region81
        $region80: #{generator_forward.1} parent=68 // pred_region
          %v419 = vld [vmem:[#allocation3] sm:$0xff]
          %v420 = vld [vmem:[#allocation3 + $0x8] sm:$0xff]
          %v421 = vld [vmem:[#allocation3 + $0x10] sm:$0xff]
          %v422 = vld [vmem:[#allocation4] sm:$0xff]
          %v423 = vld [vmem:[#allocation4 + $0x8] sm:$0xff]
          %v424 = vld [vmem:[#allocation4 + $0x10] sm:$0xff]
          %v425 = vlog2.pop %v422
          %v426 = vmul.f32 %v425, 0.6931472
          %v427 = vlog2.pop %v423
          %v428 = vmul.f32 %v427, 0.6931472
          %v429 = vlog2.pop %v424
          %v430 = vmul.f32 %v429, 0.6931472
          %v431 = vadd.f32 %v419, %v426
          %v432 = vadd.f32 %v420, %v428
          %v433 = vadd.f32 %v421, %v430
          %v434 = vld [vmem:[#allocation2] sm:$0xff]
          %v435 = vld [vmem:[#allocation2 + $0x8] sm:$0xff]
          %v436 = vld [vmem:[#allocation2 + $0x10] sm:$0xff]
          %438 = vset.pattern.permute.xlu0 0
          %439 = vperm.xlu0 %438, %v431
          %v440 = vpop.permute.xlu0 %439
          %443 = vset.pattern.permute.xlu0 0
          %444 = vperm.xlu0 %443, %v432
          %v445 = vpop.permute.xlu0 %444
          %448 = vset.pattern.permute.xlu0 0
          %449 = vperm.xlu0 %448, %v433
          %v450 = vpop.permute.xlu0 %449
          %v452 = vsub.f32 %v434, %v440
          %v453 = vsub.f32 %v435, %v445
          %v454 = vsub.f32 %v436, %v450
          %v458 = vrot.slane %v452, 1
          %v459 = vrot.slane %v452, 2
          %v460 = vrot.slane %v452, 3
          %v461 = vrot.slane %v452, 4
          %v462 = vrot.slane %v452, 5
          %v463 = vrot.slane %v452, 6
          %v464 = vrot.slane %v452, 7
          %v465 = vrot.slane %v453, 1
          %v466 = vrot.slane %v453, 2
          %v467 = vrot.slane %v453, 3
          %v468 = vrot.slane %v453, 4
          %v469 = vrot.slane %v453, 5
          %v470 = vrot.slane %v453, 6
          %v471 = vrot.slane %v453, 7
          %v472 = vrot.slane %v454, 1
          %v473 = vrot.slane %v454, 2
          %v474 = vrot.slane %v454, 3
          %v475 = vrot.slane %v454, 4
          %v476 = vrot.slane %v454, 5
          %v477 = vrot.slane %v454, 6
          %v478 = vrot.slane %v454, 7
          %500 = vst [vmem:[%s273] sm:$0x1] %v452
          %501 = vst [vmem:[%s273 + $0x4] sm:$0x1] %v458
          %502 = vst [vmem:[%s273 + $0x8] sm:$0x1] %v459
          %503 = vst [vmem:[%s273 + $0xc] sm:$0x1] %v460
          %504 = vst [vmem:[%s273 + $0x10] sm:$0x1] %v461
          %505 = vst [vmem:[%s273 + $0x14] sm:$0x1] %v462
          %506 = vst [vmem:[%s273 + $0x18] sm:$0x1] %v463
          %507 = vst [vmem:[%s273 + $0x1c] sm:$0x1] %v464
          %508 = vst [vmem:[%s273 + $0x20] sm:$0x1] %v453
          %509 = vst [vmem:[%s273 + $0x24] sm:$0x1] %v465
          %510 = vst [vmem:[%s273 + $0x28] sm:$0x1] %v466
          %511 = vst [vmem:[%s273 + $0x2c] sm:$0x1] %v467
          %512 = vst [vmem:[%s273 + $0x30] sm:$0x1] %v468
          %513 = vst [vmem:[%s273 + $0x34] sm:$0x1] %v469
          %514 = vst [vmem:[%s273 + $0x38] sm:$0x1] %v470
          %515 = vst [vmem:[%s273 + $0x3c] sm:$0x1] %v471
          %516 = vst [vmem:[%s273 + $0x40] sm:$0x1] %v454
          %517 = vst [vmem:[%s273 + $0x44] sm:$0x1] %v472
          %518 = vst [vmem:[%s273 + $0x48] sm:$0x1] %v473
          %519 = vst [vmem:[%s273 + $0x4c] sm:$0x1] %v474
          %520 = vst [vmem:[%s273 + $0x50] sm:$0x1] %v475
          %521 = vst [vmem:[%s273 + $0x54] sm:$0x1] %v476
          %522 = vst [vmem:[%s273 + $0x58] sm:$0x1] %v477
          %523 = vst [vmem:[%s273 + $0x5c] sm:$0x1] %v478
          %s524 = scalar_lea.vmem [#allocation2], 24
          %v525 = vld [vmem:[%s524] sm:$0xff]
          %v526 = vld [vmem:[%s524 + $0x8] sm:$0xff]
          %v527 = vld [vmem:[%s524 + $0x10] sm:$0xff]
          %v528 = vsub.f32 %v525, %v440
          %v529 = vsub.f32 %v526, %v445
          %v530 = vsub.f32 %v527, %v450
          %v534 = vrot.slane %v528, 1
          %v535 = vrot.slane %v528, 2
          %v536 = vrot.slane %v528, 3
          %v537 = vrot.slane %v528, 4
          %v538 = vrot.slane %v528, 5
          %v539 = vrot.slane %v528, 6
          %v540 = vrot.slane %v528, 7
          %v541 = vrot.slane %v529, 1
          %v542 = vrot.slane %v529, 2
          %v543 = vrot.slane %v529, 3
          %v544 = vrot.slane %v529, 4
          %v545 = vrot.slane %v529, 5
          %v546 = vrot.slane %v529, 6
          %v547 = vrot.slane %v529, 7
          %v548 = vrot.slane %v530, 1
          %v549 = vrot.slane %v530, 2
          %v550 = vrot.slane %v530, 3
          %v551 = vrot.slane %v530, 4
          %v552 = vrot.slane %v530, 5
          %v553 = vrot.slane %v530, 6
          %v554 = vrot.slane %v530, 7
          %576 = vst [vmem:[%s273 + $0x1] sm:$0x1] %v528
          %577 = vst [vmem:[%s273 + $0x5] sm:$0x1] %v534
          %578 = vst [vmem:[%s273 + $0x9] sm:$0x1] %v535
          %579 = vst [vmem:[%s273 + $0xd] sm:$0x1] %v536
          %580 = vst [vmem:[%s273 + $0x11] sm:$0x1] %v537
          %581 = vst [vmem:[%s273 + $0x15] sm:$0x1] %v538
          %582 = vst [vmem:[%s273 + $0x19] sm:$0x1] %v539
          %583 = vst [vmem:[%s273 + $0x1d] sm:$0x1] %v540
          %584 = vst [vmem:[%s273 + $0x21] sm:$0x1] %v529
          %585 = vst [vmem:[%s273 + $0x25] sm:$0x1] %v541
          %586 = vst [vmem:[%s273 + $0x29] sm:$0x1] %v542
          %587 = vst [vmem:[%s273 + $0x2d] sm:$0x1] %v543
          %588 = vst [vmem:[%s273 + $0x31] sm:$0x1] %v544
          %589 = vst [vmem:[%s273 + $0x35] sm:$0x1] %v545
          %590 = vst [vmem:[%s273 + $0x39] sm:$0x1] %v546
          %591 = vst [vmem:[%s273 + $0x3d] sm:$0x1] %v547
          %592 = vst [vmem:[%s273 + $0x41] sm:$0x1] %v530
          %593 = vst [vmem:[%s273 + $0x45] sm:$0x1] %v548
          %594 = vst [vmem:[%s273 + $0x49] sm:$0x1] %v549
          %595 = vst [vmem:[%s273 + $0x4d] sm:$0x1] %v550
          %596 = vst [vmem:[%s273 + $0x51] sm:$0x1] %v551
          %597 = vst [vmem:[%s273 + $0x55] sm:$0x1] %v552
          %598 = vst [vmem:[%s273 + $0x59] sm:$0x1] %v553
          %599 = vst [vmem:[%s273 + $0x5d] sm:$0x1] %v554
          %s600 = scalar_lea.vmem [#allocation2], 48
          %v601 = vld [vmem:[%s600] sm:$0xff]
          %v602 = vld [vmem:[%s600 + $0x8] sm:$0xff]
          %v603 = vld [vmem:[%s600 + $0x10] sm:$0xff]
          %v604 = vsub.f32 %v601, %v440
          %v605 = vsub.f32 %v602, %v445
          %v606 = vsub.f32 %v603, %v450
          %v610 = vrot.slane %v604, 1
          %v611 = vrot.slane %v604, 2
          %v612 = vrot.slane %v604, 3
          %v613 = vrot.slane %v604, 4
          %v614 = vrot.slane %v604, 5
          %v615 = vrot.slane %v604, 6
          %v616 = vrot.slane %v604, 7
          %v617 = vrot.slane %v605, 1
          %v618 = vrot.slane %v605, 2
          %v619 = vrot.slane %v605, 3
          %v620 = vrot.slane %v605, 4
          %v621 = vrot.slane %v605, 5
          %v622 = vrot.slane %v605, 6
          %v623 = vrot.slane %v605, 7
          %v624 = vrot.slane %v606, 1
          %v625 = vrot.slane %v606, 2
          %v626 = vrot.slane %v606, 3
          %v627 = vrot.slane %v606, 4
          %v628 = vrot.slane %v606, 5
          %v629 = vrot.slane %v606, 6
          %v630 = vrot.slane %v606, 7
          %652 = vst [vmem:[%s273 + $0x2] sm:$0x1] %v604
          %653 = vst [vmem:[%s273 + $0x6] sm:$0x1] %v610
          %654 = vst [vmem:[%s273 + $0xa] sm:$0x1] %v611
          %655 = vst [vmem:[%s273 + $0xe] sm:$0x1] %v612
          %656 = vst [vmem:[%s273 + $0x12] sm:$0x1] %v613
          %657 = vst [vmem:[%s273 + $0x16] sm:$0x1] %v614
          %658 = vst [vmem:[%s273 + $0x1a] sm:$0x1] %v615
          %659 = vst [vmem:[%s273 + $0x1e] sm:$0x1] %v616
          %660 = vst [vmem:[%s273 + $0x22] sm:$0x1] %v605
          %661 = vst [vmem:[%s273 + $0x26] sm:$0x1] %v617
          %662 = vst [vmem:[%s273 + $0x2a] sm:$0x1] %v618
          %663 = vst [vmem:[%s273 + $0x2e] sm:$0x1] %v619
          %664 = vst [vmem:[%s273 + $0x32] sm:$0x1] %v620
          %665 = vst [vmem:[%s273 + $0x36] sm:$0x1] %v621
          %666 = vst [vmem:[%s273 + $0x3a] sm:$0x1] %v622
          %667 = vst [vmem:[%s273 + $0x3e] sm:$0x1] %v623
          %668 = vst [vmem:[%s273 + $0x42] sm:$0x1] %v606
          %669 = vst [vmem:[%s273 + $0x46] sm:$0x1] %v624
          %670 = vst [vmem:[%s273 + $0x4a] sm:$0x1] %v625
          %671 = vst [vmem:[%s273 + $0x4e] sm:$0x1] %v626
          %672 = vst [vmem:[%s273 + $0x52] sm:$0x1] %v627
          %673 = vst [vmem:[%s273 + $0x56] sm:$0x1] %v628
          %674 = vst [vmem:[%s273 + $0x5a] sm:$0x1] %v629
          %675 = vst [vmem:[%s273 + $0x5e] sm:$0x1] %v630
        $region81: #{generator_forward.1} parent=68 // pred_fallthru
          _
        %s676 = smul.u32 24, %s18
        %p677 = scmp.lt.s32.totalorder %s676, 23
        %s678 = scalar_select %p677, %s676, 23
        %s679 = smul.addr %s678, 4
        %s680 = scalar_lea.vmem %s3, %s679
        // Predicated region
        $region82: #{generator_forward.1} parent=68 // pred_check
          %p681 = pneg %p122
        $region83: #{generator_forward.1} parent=68 // pred_check_branch
          %683 = sbr.rel (%p681) target = $region85
        $region84: #{generator_forward.1} parent=68 // pred_region
          %s684 = smul.u32 24, %s18
        $region85: #{generator_forward.1} parent=68 // pred_fallthru
          _
        // Predicated region
        $region86: #{generator_forward.1} parent=68 // pred_check
          %p685 = pneg %p122
        $region87: #{generator_forward.1} parent=68 // pred_check_branch
          %687 = sbr.rel (%p685) target = $region89
        $region88: #{generator_forward.1} parent=68 // pred_region
          %s688 = smul.u32 24, %s18
          %p689 = scmp.lt.s32.totalorder %s688, 23
          %s690 = scalar_select %p689, %s688, 23
          %s691 = smul.addr %s690, 4
          %s692 = scalar_lea.vmem %s3, %s691
        $region89: #{generator_forward.1} parent=68 // pred_fallthru
          _
      $region69: #{generator_forward.1} parent=5 // pred_fallthru
        _
      %p693 = scmp.le.s32.totalorder 2, %s9
      // Predicated region
      $region90: #{generator_forward.1} parent=5 // pred_check
        %p694 = pneg %p693
      $region91: #{generator_forward.1} parent=5 // pred_check_branch
        %696 = sbr.rel (%p694) target = $region93
      $region92: #{generator_forward.1} parent=5 // pred_region
        %s697 = ssub.s32 %s9, 2
      $region93: #{generator_forward.1} parent=5 // pred_fallthru
        _
    $region6: #{generator_forward.1} parent=1 // loop_footer
      %s13 = sadd.s32 1, %s9
    $region7: #{generator_forward.1} parent=1 // loop_footer_branch
      %8 = sbr.rel target = $region3
    $region8: #{generator_forward.1} parent=1 // loop_exit
      _

</llo_original>
